<compile_context>
chip_gen: v6e
topology: v6e:2x2x1
jax: 0.10.0
libtpu: 0.0.40
codegen_flags: <defaults>
</compile_context>

<pallas_src>
import functools

import numpy as np

import jax
import jax.numpy as jnp
from jax.experimental import pallas as pl
from jax.experimental.pallas import tpu as pltpu

EPS = 1e-5  # PyTorch BatchNorm2d default


def _round_up(x, m):
    return (x + m - 1) // m * m


# ------------------------------ fused kernel ------------------------------- #
def _fused_basic_block_kernel(*refs, M, Mp, Wo, conv1_in_kernel, has_projection):
    """conv1+bn1+relu -> shortcut (1x1 conv+bn | identity) -> conv2+bn2+add+relu.

    Activations live in a lane-dense channel-major (C, Mp) layout with
    M = N*Ho*Wo zero-padded to Mp (multiple of 128) on the lane axis.
    """
    (msk_ref, a1_ref, w1_ref, g1_ref, b1_ref) = refs[:5]
    rest = refs[5:]
    if has_projection:
        if conv1_in_kernel:
            scw_ref, gsc_ref, bsc_ref = rest[:3]
            rest = rest[3:]
        else:
            sca_ref, scw_ref, gsc_ref, bsc_ref = rest[:4]
            rest = rest[4:]
    w2_ref, g2_ref, b2_ref, o_ref = rest

    msk = msk_ref[...]            # (10, Mp) f32: rows 0..8 tap masks, row 9 lane-valid
    lane_valid = msk[9:10, :]     # (1, Mp)
    inv_m = 1.0 / M

    def bn(acc, g, b):
        # Training-mode batch statistics (matches the reference); two-pass for
        # numerical robustness; zero-padded lanes masked out of both passes.
        mean = jnp.sum(acc * lane_valid, axis=-1, keepdims=True) * inv_m
        cent = (acc - mean) * lane_valid
        var = jnp.sum(cent * cent, axis=-1, keepdims=True) * inv_m
        return (acc - mean) * jax.lax.rsqrt(var + EPS) * g + b

    def stack_taps(src_f32):
        # src (C, Mp) f32 -> (9*C, Mp) bf16.  Each 3x3 tap is a static lane
        # rotation (XLU) of the VMEM-resident activation, multiplied by a
        # precomputed 0/1 border mask, stacked so the conv is ONE MXU matmul.
        chunks = []
        for tap in range(9):
            dy, dx = tap // 3 - 1, tap % 3 - 1
            d = dy * Wo + dx
            if d == 0:
                chunks.append(src_f32)
            else:
                sh = pltpu.roll(src_f32, shift=(-d) % Mp, axis=1)
                chunks.append(sh * msk[tap:tap + 1, :])
        return jnp.concatenate(chunks, axis=0).astype(jnp.bfloat16)

    # ---- conv1 + bn1 + relu ------------------------------------------------
    if conv1_in_kernel:                       # stride 1: extract patches here
        a1 = stack_taps(a1_ref[...])
    else:                                     # stride != 1: host-built (K, Mp) bf16
        a1 = a1_ref[...]
    acc1 = jnp.dot(w1_ref[...], a1, preferred_element_type=jnp.float32)
    out1 = jnp.maximum(bn(acc1, g1_ref[...], b1_ref[...]), 0.0)

    # ---- shortcut ------------------------------------------------------------
    if has_projection:
        sca = (a1_ref[...].astype(jnp.bfloat16) if conv1_in_kernel
               else sca_ref[...])
        acc_sc = jnp.dot(scw_ref[...], sca, preferred_element_type=jnp.float32)
        res = bn(acc_sc, gsc_ref[...], bsc_ref[...])
    else:
        res = a1_ref[...]                     # identity residual, exact f32

    # ---- conv2 + bn2 + residual add + relu: ONE stacked-tap matmul ----------
    a2 = stack_taps(out1)
    acc2 = jnp.dot(w2_ref[...], a2, preferred_element_type=jnp.float32)
    out2 = bn(acc2, g2_ref[...], b2_ref[...]) + res
    o_ref[...] = jnp.maximum(out2, 0.0).astype(o_ref.dtype)


# ------------------------------- host helpers ------------------------------- #
def _pad_col(v, rows):
    return jnp.zeros((rows, 1), jnp.float32).at[:v.shape[0], 0].set(v)


def _stack_conv_weights(w_hwio, cin_pad, cout_pad):
    """(3,3,Cin,Cout) HWIO -> (cout_pad, 9*cin_pad) bf16, taps row-major, cin inner."""
    _, _, cin, cout = w_hwio.shape
    ws = jnp.zeros((cout_pad, 9 * cin_pad), jnp.float32)
    for tap in range(9):
        ky, kx = tap // 3, tap % 3
        ws = ws.at[:cout, tap * cin_pad:tap * cin_pad + cin].set(w_hwio[ky, kx].T)
    return ws.astype(jnp.bfloat16)


def _masks(Ho, Wo, M, Mp):
    """Compile-time (10, Mp) f32: rows 0..8 = 3x3 border masks, row 9 = lane-valid."""
    m = np.arange(Mp)
    yy = (m % (Ho * Wo)) // Wo
    xx = m % Wo
    lane = m < M
    rows = np.zeros((10, Mp), np.float32)
    for tap in range(9):
        dy, dx = tap // 3 - 1, tap % 3 - 1
        rows[tap] = (lane & (yy + dy >= 0) & (yy + dy < Ho)
                     & (xx + dx >= 0) & (xx + dx < Wo)).astype(np.float32)
    rows[9] = lane.astype(np.float32)
    return jnp.asarray(rows)


def _im2col_channel_major(x_cm, stride, Ho, Wo, cin_pad, Mp):
    """Channel-major im2col for the stride!=1 conv1: (9*cin_pad, Mp) bf16."""
    Cin, N, H, W = x_cm.shape
    M = N * Ho * Wo
    xp = jnp.pad(x_cm, ((0, 0), (0, 0), (1, 1), (1, 1)))
    chunks = []
    for dy in range(3):
        for dx in range(3):
            patch = xp[:, :, dy:dy + (Ho - 1) * stride + 1:stride,
                             dx:dx + (Wo - 1) * stride + 1:stride]
            chunk = jnp.zeros((cin_pad, Mp), jnp.float32)
            chunk = chunk.at[:Cin, :M].set(patch.reshape(Cin, M))
            chunks.append(chunk)
    return jnp.concatenate(chunks, axis=0).astype(jnp.bfloat16)


# --------------------------------- wrapper ---------------------------------- #
def basic_block_forward(x_nchw, params, stride):
    """Pallas BasicBlock.forward.  x_nchw: (N, Cin, H, W) f32 (PyTorch layout)."""
    N, Cin, H, W = x_nchw.shape
    w1 = params["w1"]                       # (3, 3, Cin, planes) HWIO
    planes = w1.shape[-1]
    Ho = (H + 2 - 3) // stride + 1
    Wo = (W + 2 - 3) // stride + 1
    M = N * Ho * Wo
    Mp = _round_up(M, 128)                  # lane-dense stores for any N/H/W
    P = _round_up(planes, 16)               # bf16 sublane packing
    CinP = _round_up(Cin, 16)

    conv1_in_kernel = (stride == 1)
    has_projection = (stride != 1) or (Cin != planes)

    x_cm = jnp.transpose(x_nchw, (1, 0, 2, 3))        # (Cin, N, H, W)

    masks = _masks(Ho, Wo, M, Mp)                     # (10, Mp) f32
    w1s = _stack_conv_weights(w1, CinP, P)            # (P, 9*CinP) bf16
    w2s = _stack_conv_weights(params["w2"], P, P)     # (P, 9*P)   bf16
    g1, b1 = _pad_col(params["g1"], P), _pad_col(params["b1"], P)
    g2, b2 = _pad_col(params["g2"], P), _pad_col(params["b2"], P)

    if conv1_in_kernel:
        # Raw channel-major input, read once; also the residual / 1x1 source.
        a1 = jnp.zeros((CinP, Mp), jnp.float32).at[:Cin, :M].set(
            x_cm.reshape(Cin, N * H * W))
    else:
        a1 = _im2col_channel_major(x_cm, stride, Ho, Wo, CinP, Mp)

    args = [masks, a1, w1s, g1, b1]
    if has_projection:
        if not conv1_in_kernel:
            xs = x_cm[:, :, ::stride, ::stride].reshape(Cin, M)
            sca = jnp.zeros((CinP, Mp), jnp.float32).at[:Cin, :M].set(xs)
            args.append(sca.astype(jnp.bfloat16))
        scw = jnp.zeros((P, CinP), jnp.float32).at[:planes, :Cin].set(
            params["wsc"].reshape(Cin, planes).T)
        args += [scw.astype(jnp.bfloat16),
                 _pad_col(params["gsc"], P), _pad_col(params["bsc"], P)]
    args += [w2s, g2, b2]

    # VMEM budget (everything — operands, stacked tap operands, f32
    # intermediates — is resident in this grid-less design) + cost hint.
    in_bytes = sum(int(a.size) * a.dtype.itemsize for a in args)
    out_bytes = P * Mp * 4
    need = (in_bytes + out_bytes
            + (9 * CinP + 9 * P) * Mp * 6      # stacked tap operands (f32+bf16)
            + 6 * P * Mp * 4)                  # f32 intermediates
    vmem_limit = int(min(max(2 * need, 16 << 20), 64 << 20))
    flops = 2 * P * (9 * CinP) * Mp + 2 * P * (9 * P) * Mp
    if has_projection:
        flops += 2 * P * CinP * Mp

    kernel = functools.partial(
        _fused_basic_block_kernel, M=M, Mp=Mp, Wo=Wo,
        conv1_in_kernel=conv1_in_kernel, has_projection=has_projection)
    vmem = pl.BlockSpec(memory_space=pltpu.MemorySpace.VMEM)

    out = pl.pallas_call(
        kernel,
        out_shape=jax.ShapeDtypeStruct((P, Mp), jnp.float32),
        in_specs=[vmem] * len(args),
        out_specs=vmem,
        compiler_params=pltpu.CompilerParams(vmem_limit_bytes=vmem_limit),
        cost_estimate=pl.CostEstimate(flops=flops, transcendentals=3 * P,
                                      bytes_accessed=in_bytes + out_bytes),
    )(*args)

    # (P, Mp) -> (N, planes, Ho, Wo)  (NCHW, matching the PyTorch module)
    out = out[:planes, :M].reshape(planes, N, Ho, Wo)
    return jnp.transpose(out, (1, 0, 2, 3))


# ---------------------------- pure-JAX reference ---------------------------- #
def _ref_forward(x_nchw, params, stride):
    dn = ("NCHW", "HWIO", "NCHW")
    hi = jax.lax.Precision.HIGHEST

    def bn(y, g, b):
        mean = jnp.mean(y, axis=(0, 2, 3), keepdims=True)
        var = jnp.mean((y - mean) ** 2, axis=(0, 2, 3), keepdims=True)
        return ((y - mean) * jax.lax.rsqrt(var + EPS)
                * g.reshape(1, -1, 1, 1) + b.reshape(1, -1, 1, 1))

    out = jax.lax.conv_general_dilated(x_nchw, params["w1"], (stride, stride),
                                       ((1, 1), (1, 1)), dimension_numbers=dn,
                                       precision=hi)
    out = jax.nn.relu(bn(out, params["g1"], params["b1"]))
    out = jax.lax.conv_general_dilated(out, params["w2"], (1, 1),
                                       ((1, 1), (1, 1)), dimension_numbers=dn,
                                       precision=hi)
    out = bn(out, params["g2"], params["b2"])
    Cin, planes = params["w1"].shape[2], params["w1"].shape[3]
    if stride != 1 or Cin != planes:
        sc = jax.lax.conv_general_dilated(x_nchw, params["wsc"],
                                          (stride, stride), ((0, 0), (0, 0)),
                                          dimension_numbers=dn, precision=hi)
        sc = bn(sc, params["gsc"], params["bsc"])
    else:
        sc = x_nchw
    return jax.nn.relu(out + sc)


# --------------------------------- main ------------------------------------ #
def make_params(key, in_planes, planes):
    ks = jax.random.split(key, 9)
    return {
        "w1": jax.random.normal(ks[0], (3, 3, in_planes, planes), jnp.float32) * 0.2,
        "g1": 1.0 + 0.1 * jax.random.normal(ks[1], (planes,), jnp.float32),
        "b1": 0.1 * jax.random.normal(ks[2], (planes,), jnp.float32),
        "w2": jax.random.normal(ks[3], (3, 3, planes, planes), jnp.float32) * 0.2,
        "g2": 1.0 + 0.1 * jax.random.normal(ks[4], (planes,), jnp.float32),
        "b2": 0.1 * jax.random.normal(ks[5], (planes,), jnp.float32),
        "wsc": jax.random.normal(ks[6], (1, 1, in_planes, planes), jnp.float32) * 0.2,
        "gsc": 1.0 + 0.1 * jax.random.normal(ks[7], (planes,), jnp.float32),
        "bsc": 0.1 * jax.random.normal(ks[8], (planes,), jnp.float32),
    }


if __name__ == "__main__":
    key = jax.random.PRNGKey(0)
    kx1, kp1, kx2, kp2, kx3, kp3 = jax.random.split(key, 6)

    def check(x, params, stride, name):
        out = jax.block_until_ready(basic_block_forward(x, params, stride))
        ref = jax.block_until_ready(_ref_forward(x, params, stride))
        assert out.shape == ref.shape, (name, out.shape, ref.shape)
        err = float(jnp.max(jnp.abs(out - ref)))
        # bf16 MXU operands (f32 accumulation / BN) -> looser tolerance than f32.
        assert jnp.allclose(out, ref, rtol=5e-2, atol=5e-2), \
            f"{name}: max abs err {err}"

    # case 1: projection shortcut (stride=2, Cin != planes), M = 128
    x1 = jax.random.normal(kx1, (2, 4, 16, 16), jnp.float32)   # NCHW
    check(x1, make_params(kp1, 4, 8), 2, "projection")

    # case 2: identity shortcut (stride=1, Cin == planes), M = 128
    x2 = jax.random.normal(kx2, (2, 8, 8, 8), jnp.float32)
    check(x2, make_params(kp2, 8, 8), 1, "identity")

    # case 3: identity shortcut with ragged M (1*10*10 = 100 -> padded to 128 lanes)
    x3 = jax.random.normal(kx3, (1, 4, 10, 10), jnp.float32)
    check(x3, make_params(kp3, 4, 4), 1, "identity-ragged-M")

    print("KERNEL_OK")
</pallas_src>

<mosaic_0001>
module attributes {stable_mosaic.version = 11 : i64} {
  func.func @_fused_basic_block_kernel(%arg0: memref<10x128xf32, #tpu.memory_space<vmem>>, %arg1: memref<144x128xbf16, #tpu.memory_space<vmem>>, %arg2: memref<16x144xbf16, #tpu.memory_space<vmem>>, %arg3: memref<16x1xf32, #tpu.memory_space<vmem>>, %arg4: memref<16x1xf32, #tpu.memory_space<vmem>>, %arg5: memref<16x128xbf16, #tpu.memory_space<vmem>>, %arg6: memref<16x16xbf16, #tpu.memory_space<vmem>>, %arg7: memref<16x1xf32, #tpu.memory_space<vmem>>, %arg8: memref<16x1xf32, #tpu.memory_space<vmem>>, %arg9: memref<16x144xbf16, #tpu.memory_space<vmem>>, %arg10: memref<16x1xf32, #tpu.memory_space<vmem>>, %arg11: memref<16x1xf32, #tpu.memory_space<vmem>>, %arg12: memref<16x128xf32, #tpu.memory_space<vmem>>) attributes {dimension_semantics = [], scalar_prefetch = 0 : i64, scratch_operands = 0 : i64, tpu.core_type = #tpu.core_type<tc>} {
    %c0 = arith.constant 0 : index
    %c0_0 = arith.constant 0 : index
    %0 = vector.load %arg0[%c0, %c0_0] : memref<10x128xf32, #tpu.memory_space<vmem>>, vector<10x128xf32>
    %1 = vector.extract_strided_slice %0 {offsets = [9, 0], sizes = [1, 128], strides = [1, 1]} : vector<10x128xf32> to vector<1x128xf32>
    %c0_1 = arith.constant 0 : index
    %c0_2 = arith.constant 0 : index
    %2 = vector.load %arg1[%c0_1, %c0_2] : memref<144x128xbf16, #tpu.memory_space<vmem>>, vector<144x128xbf16>
    %c0_3 = arith.constant 0 : index
    %c0_4 = arith.constant 0 : index
    %3 = vector.load %arg2[%c0_3, %c0_4] : memref<16x144xbf16, #tpu.memory_space<vmem>>, vector<16x144xbf16>
    %cst = arith.constant dense<0.000000e+00> : vector<16x128xf32>
    %4 = tpu.matmul %3, %2, %cst {dimension_numbers = #tpu.dot_dimension_numbers<[1], [0], [0], [1], [0, 0, 1, 1], [], []>} : vector<16x144xbf16>, vector<144x128xbf16>, vector<16x128xf32> -> vector<16x128xf32>
    %c0_5 = arith.constant 0 : index
    %c0_6 = arith.constant 0 : index
    %5 = vector.load %arg3[%c0_5, %c0_6] : memref<16x1xf32, #tpu.memory_space<vmem>>, vector<16x1xf32>
    %c0_7 = arith.constant 0 : index
    %c0_8 = arith.constant 0 : index
    %6 = vector.load %arg4[%c0_7, %c0_8] : memref<16x1xf32, #tpu.memory_space<vmem>>, vector<16x1xf32>
    %7 = vector.broadcast %1 : vector<1x128xf32> to vector<16x128xf32>
    %8 = arith.mulf %4, %7 : vector<16x128xf32>
    %cst_9 = arith.constant dense<0.000000e+00> : vector<16xf32>
    %9 = vector.multi_reduction <add>, %8, %cst_9 [1] : vector<16x128xf32> to vector<16xf32>
    %10 = vector.shape_cast %9 : vector<16xf32> to vector<16x1xf32>
    %cst_10 = arith.constant 7.812500e-03 : f32
    %11 = vector.broadcast %cst_10 : f32 to vector<16x1xf32>
    %12 = arith.mulf %10, %11 : vector<16x1xf32>
    %13 = vector.broadcast %12 : vector<16x1xf32> to vector<16x128xf32>
    %14 = arith.subf %4, %13 : vector<16x128xf32>
    %15 = vector.broadcast %1 : vector<1x128xf32> to vector<16x128xf32>
    %16 = arith.mulf %14, %15 : vector<16x128xf32>
    %17 = arith.mulf %16, %16 : vector<16x128xf32>
    %cst_11 = arith.constant dense<0.000000e+00> : vector<16xf32>
    %18 = vector.multi_reduction <add>, %17, %cst_11 [1] : vector<16x128xf32> to vector<16xf32>
    %19 = vector.shape_cast %18 : vector<16xf32> to vector<16x1xf32>
    %cst_12 = arith.constant 7.812500e-03 : f32
    %20 = vector.broadcast %cst_12 : f32 to vector<16x1xf32>
    %21 = arith.mulf %19, %20 : vector<16x1xf32>
    %22 = vector.broadcast %12 : vector<16x1xf32> to vector<16x128xf32>
    %23 = arith.subf %4, %22 : vector<16x128xf32>
    %cst_13 = arith.constant 9.99999974E-6 : f32
    %24 = vector.broadcast %cst_13 : f32 to vector<16x1xf32>
    %25 = arith.addf %21, %24 : vector<16x1xf32>
    %26 = math.rsqrt %25 : vector<16x1xf32>
    %27 = vector.broadcast %26 : vector<16x1xf32> to vector<16x128xf32>
    %28 = arith.mulf %23, %27 : vector<16x128xf32>
    %29 = vector.broadcast %5 : vector<16x1xf32> to vector<16x128xf32>
    %30 = arith.mulf %28, %29 : vector<16x128xf32>
    %31 = vector.broadcast %6 : vector<16x1xf32> to vector<16x128xf32>
    %32 = arith.addf %30, %31 : vector<16x128xf32>
    %cst_14 = arith.constant 0.000000e+00 : f32
    %33 = vector.broadcast %cst_14 : f32 to vector<16x128xf32>
    %34 = arith.maximumf %32, %33 : vector<16x128xf32>
    %c0_15 = arith.constant 0 : index
    %c0_16 = arith.constant 0 : index
    %35 = vector.load %arg5[%c0_15, %c0_16] : memref<16x128xbf16, #tpu.memory_space<vmem>>, vector<16x128xbf16>
    %c0_17 = arith.constant 0 : index
    %c0_18 = arith.constant 0 : index
    %36 = vector.load %arg6[%c0_17, %c0_18] : memref<16x16xbf16, #tpu.memory_space<vmem>>, vector<16x16xbf16>
    %cst_19 = arith.constant dense<0.000000e+00> : vector<16x128xf32>
    %37 = tpu.matmul %36, %35, %cst_19 {dimension_numbers = #tpu.dot_dimension_numbers<[1], [0], [0], [1], [0, 0, 1, 1], [], []>} : vector<16x16xbf16>, vector<16x128xbf16>, vector<16x128xf32> -> vector<16x128xf32>
    %c0_20 = arith.constant 0 : index
    %c0_21 = arith.constant 0 : index
    %38 = vector.load %arg7[%c0_20, %c0_21] : memref<16x1xf32, #tpu.memory_space<vmem>>, vector<16x1xf32>
    %c0_22 = arith.constant 0 : index
    %c0_23 = arith.constant 0 : index
    %39 = vector.load %arg8[%c0_22, %c0_23] : memref<16x1xf32, #tpu.memory_space<vmem>>, vector<16x1xf32>
    %40 = vector.broadcast %1 : vector<1x128xf32> to vector<16x128xf32>
    %41 = arith.mulf %37, %40 : vector<16x128xf32>
    %cst_24 = arith.constant dense<0.000000e+00> : vector<16xf32>
    %42 = vector.multi_reduction <add>, %41, %cst_24 [1] : vector<16x128xf32> to vector<16xf32>
    %43 = vector.shape_cast %42 : vector<16xf32> to vector<16x1xf32>
    %cst_25 = arith.constant 7.812500e-03 : f32
    %44 = vector.broadcast %cst_25 : f32 to vector<16x1xf32>
    %45 = arith.mulf %43, %44 : vector<16x1xf32>
    %46 = vector.broadcast %45 : vector<16x1xf32> to vector<16x128xf32>
    %47 = arith.subf %37, %46 : vector<16x128xf32>
    %48 = vector.broadcast %1 : vector<1x128xf32> to vector<16x128xf32>
    %49 = arith.mulf %47, %48 : vector<16x128xf32>
    %50 = arith.mulf %49, %49 : vector<16x128xf32>
    %cst_26 = arith.constant dense<0.000000e+00> : vector<16xf32>
    %51 = vector.multi_reduction <add>, %50, %cst_26 [1] : vector<16x128xf32> to vector<16xf32>
    %52 = vector.shape_cast %51 : vector<16xf32> to vector<16x1xf32>
    %cst_27 = arith.constant 7.812500e-03 : f32
    %53 = vector.broadcast %cst_27 : f32 to vector<16x1xf32>
    %54 = arith.mulf %52, %53 : vector<16x1xf32>
    %55 = vector.broadcast %45 : vector<16x1xf32> to vector<16x128xf32>
    %56 = arith.subf %37, %55 : vector<16x128xf32>
    %cst_28 = arith.constant 9.99999974E-6 : f32
    %57 = vector.broadcast %cst_28 : f32 to vector<16x1xf32>
    %58 = arith.addf %54, %57 : vector<16x1xf32>
    %59 = math.rsqrt %58 : vector<16x1xf32>
    %60 = vector.broadcast %59 : vector<16x1xf32> to vector<16x128xf32>
    %61 = arith.mulf %56, %60 : vector<16x128xf32>
    %62 = vector.broadcast %38 : vector<16x1xf32> to vector<16x128xf32>
    %63 = arith.mulf %61, %62 : vector<16x128xf32>
    %64 = vector.broadcast %39 : vector<16x1xf32> to vector<16x128xf32>
    %65 = arith.addf %63, %64 : vector<16x128xf32>
    %c9_i32 = arith.constant 9 : i32
    %66 = tpu.dynamic_rotate %34 by %c9_i32 dim 1 : vector<16x128xf32>, i32 -> vector<16x128xf32>
    %67 = vector.extract_strided_slice %0 {offsets = [0, 0], sizes = [1, 128], strides = [1, 1]} : vector<10x128xf32> to vector<1x128xf32>
    %68 = vector.broadcast %67 : vector<1x128xf32> to vector<16x128xf32>
    %69 = arith.mulf %66, %68 : vector<16x128xf32>
    %c8_i32 = arith.constant 8 : i32
    %70 = tpu.dynamic_rotate %34 by %c8_i32 dim 1 : vector<16x128xf32>, i32 -> vector<16x128xf32>
    %71 = vector.extract_strided_slice %0 {offsets = [1, 0], sizes = [1, 128], strides = [1, 1]} : vector<10x128xf32> to vector<1x128xf32>
    %72 = vector.broadcast %71 : vector<1x128xf32> to vector<16x128xf32>
    %73 = arith.mulf %70, %72 : vector<16x128xf32>
    %c7_i32 = arith.constant 7 : i32
    %74 = tpu.dynamic_rotate %34 by %c7_i32 dim 1 : vector<16x128xf32>, i32 -> vector<16x128xf32>
    %75 = vector.extract_strided_slice %0 {offsets = [2, 0], sizes = [1, 128], strides = [1, 1]} : vector<10x128xf32> to vector<1x128xf32>
    %76 = vector.broadcast %75 : vector<1x128xf32> to vector<16x128xf32>
    %77 = arith.mulf %74, %76 : vector<16x128xf32>
    %c1_i32 = arith.constant 1 : i32
    %78 = tpu.dynamic_rotate %34 by %c1_i32 dim 1 : vector<16x128xf32>, i32 -> vector<16x128xf32>
    %79 = vector.extract_strided_slice %0 {offsets = [3, 0], sizes = [1, 128], strides = [1, 1]} : vector<10x128xf32> to vector<1x128xf32>
    %80 = vector.broadcast %79 : vector<1x128xf32> to vector<16x128xf32>
    %81 = arith.mulf %78, %80 : vector<16x128xf32>
    %c127_i32 = arith.constant 127 : i32
    %82 = tpu.dynamic_rotate %34 by %c127_i32 dim 1 : vector<16x128xf32>, i32 -> vector<16x128xf32>
    %83 = vector.extract_strided_slice %0 {offsets = [5, 0], sizes = [1, 128], strides = [1, 1]} : vector<10x128xf32> to vector<1x128xf32>
    %84 = vector.broadcast %83 : vector<1x128xf32> to vector<16x128xf32>
    %85 = arith.mulf %82, %84 : vector<16x128xf32>
    %c121_i32 = arith.constant 121 : i32
    %86 = tpu.dynamic_rotate %34 by %c121_i32 dim 1 : vector<16x128xf32>, i32 -> vector<16x128xf32>
    %87 = vector.extract_strided_slice %0 {offsets = [6, 0], sizes = [1, 128], strides = [1, 1]} : vector<10x128xf32> to vector<1x128xf32>
    %88 = vector.broadcast %87 : vector<1x128xf32> to vector<16x128xf32>
    %89 = arith.mulf %86, %88 : vector<16x128xf32>
    %c120_i32 = arith.constant 120 : i32
    %90 = tpu.dynamic_rotate %34 by %c120_i32 dim 1 : vector<16x128xf32>, i32 -> vector<16x128xf32>
    %91 = vector.extract_strided_slice %0 {offsets = [7, 0], sizes = [1, 128], strides = [1, 1]} : vector<10x128xf32> to vector<1x128xf32>
    %92 = vector.broadcast %91 : vector<1x128xf32> to vector<16x128xf32>
    %93 = arith.mulf %90, %92 : vector<16x128xf32>
    %c119_i32 = arith.constant 119 : i32
    %94 = tpu.dynamic_rotate %34 by %c119_i32 dim 1 : vector<16x128xf32>, i32 -> vector<16x128xf32>
    %95 = vector.extract_strided_slice %0 {offsets = [8, 0], sizes = [1, 128], strides = [1, 1]} : vector<10x128xf32> to vector<1x128xf32>
    %96 = vector.broadcast %95 : vector<1x128xf32> to vector<16x128xf32>
    %97 = arith.mulf %94, %96 : vector<16x128xf32>
    %98 = tpu.concatenate %69, %73, %77, %81, %34, %85, %89, %93, %97 in 0 : vector<16x128xf32>, vector<16x128xf32>, vector<16x128xf32>, vector<16x128xf32>, vector<16x128xf32>, vector<16x128xf32>, vector<16x128xf32>, vector<16x128xf32>, vector<16x128xf32> -> vector<144x128xf32>
    %99 = arith.truncf %98 : vector<144x128xf32> to vector<144x128xbf16>
    %c0_29 = arith.constant 0 : index
    %c0_30 = arith.constant 0 : index
    %100 = vector.load %arg9[%c0_29, %c0_30] : memref<16x144xbf16, #tpu.memory_space<vmem>>, vector<16x144xbf16>
    %cst_31 = arith.constant dense<0.000000e+00> : vector<16x128xf32>
    %101 = tpu.matmul %100, %99, %cst_31 {dimension_numbers = #tpu.dot_dimension_numbers<[1], [0], [0], [1], [0, 0, 1, 1], [], []>} : vector<16x144xbf16>, vector<144x128xbf16>, vector<16x128xf32> -> vector<16x128xf32>
    %c0_32 = arith.constant 0 : index
    %c0_33 = arith.constant 0 : index
    %102 = vector.load %arg10[%c0_32, %c0_33] : memref<16x1xf32, #tpu.memory_space<vmem>>, vector<16x1xf32>
    %c0_34 = arith.constant 0 : index
    %c0_35 = arith.constant 0 : index
    %103 = vector.load %arg11[%c0_34, %c0_35] : memref<16x1xf32, #tpu.memory_space<vmem>>, vector<16x1xf32>
    %104 = vector.broadcast %1 : vector<1x128xf32> to vector<16x128xf32>
    %105 = arith.mulf %101, %104 : vector<16x128xf32>
    %cst_36 = arith.constant dense<0.000000e+00> : vector<16xf32>
    %106 = vector.multi_reduction <add>, %105, %cst_36 [1] : vector<16x128xf32> to vector<16xf32>
    %107 = vector.shape_cast %106 : vector<16xf32> to vector<16x1xf32>
    %cst_37 = arith.constant 7.812500e-03 : f32
    %108 = vector.broadcast %cst_37 : f32 to vector<16x1xf32>
    %109 = arith.mulf %107, %108 : vector<16x1xf32>
    %110 = vector.broadcast %109 : vector<16x1xf32> to vector<16x128xf32>
    %111 = arith.subf %101, %110 : vector<16x128xf32>
    %112 = vector.broadcast %1 : vector<1x128xf32> to vector<16x128xf32>
    %113 = arith.mulf %111, %112 : vector<16x128xf32>
    %114 = arith.mulf %113, %113 : vector<16x128xf32>
    %cst_38 = arith.constant dense<0.000000e+00> : vector<16xf32>
    %115 = vector.multi_reduction <add>, %114, %cst_38 [1] : vector<16x128xf32> to vector<16xf32>
    %116 = vector.shape_cast %115 : vector<16xf32> to vector<16x1xf32>
    %cst_39 = arith.constant 7.812500e-03 : f32
    %117 = vector.broadcast %cst_39 : f32 to vector<16x1xf32>
    %118 = arith.mulf %116, %117 : vector<16x1xf32>
    %119 = vector.broadcast %109 : vector<16x1xf32> to vector<16x128xf32>
    %120 = arith.subf %101, %119 : vector<16x128xf32>
    %cst_40 = arith.constant 9.99999974E-6 : f32
    %121 = vector.broadcast %cst_40 : f32 to vector<16x1xf32>
    %122 = arith.addf %118, %121 : vector<16x1xf32>
    %123 = math.rsqrt %122 : vector<16x1xf32>
    %124 = vector.broadcast %123 : vector<16x1xf32> to vector<16x128xf32>
    %125 = arith.mulf %120, %124 : vector<16x128xf32>
    %126 = vector.broadcast %102 : vector<16x1xf32> to vector<16x128xf32>
    %127 = arith.mulf %125, %126 : vector<16x128xf32>
    %128 = vector.broadcast %103 : vector<16x1xf32> to vector<16x128xf32>
    %129 = arith.addf %127, %128 : vector<16x128xf32>
    %130 = arith.addf %129, %65 : vector<16x128xf32>
    %cst_41 = arith.constant 0.000000e+00 : f32
    %131 = vector.broadcast %cst_41 : f32 to vector<16x128xf32>
    %132 = arith.maximumf %130, %131 : vector<16x128xf32>
    %c0_42 = arith.constant 0 : index
    %c0_43 = arith.constant 0 : index
    %133 = vector.load %arg12[%c0_42, %c0_43] : memref<16x128xf32, #tpu.memory_space<vmem>>, vector<16x128xf32>
    tpu.vector_store %arg12[%c0_42, %c0_43], %132 {strides = array<i32>} : memref<16x128xf32, #tpu.memory_space<vmem>>, vector<16x128xf32>,
    return
  }
}

</mosaic_0001>

<llo_original>
// kernel: tpu_custom_call.1
$region0: #{tpu_custom_call.1}
  #allocation0 [shape = 'u32[]', space=smem, size = 0x4, offset = 0x4, fixed_abs, tag = 'smem constant byte address 0x4 - core index']
  #allocation1 [shape = 'u32[144,128]{1,0:T(1,128)}', space=vmem, size = 0x12000, scoped, tag = 'internal scratch']
  %s0 = inlined_call_operand.vmem [shape: f32[10,128], index: 0, kind: input, shape index: {}]
  %s1 = inlined_call_operand.vmem [shape: bf16[144,128], index: 1, kind: input, shape index: {}]
  %s2 = inlined_call_operand.vmem [shape: bf16[16,144], index: 2, kind: input, shape index: {}]
  %s3 = inlined_call_operand.vmem [shape: f32[16,1], index: 3, kind: input, shape index: {}]
  %s4 = inlined_call_operand.vmem [shape: f32[16,1], index: 4, kind: input, shape index: {}]
  %s5 = inlined_call_operand.hbm [shape: bf16[16,128], index: 5, kind: input, shape index: {}]
  %s6 = inlined_call_operand.vmem [shape: bf16[16,16], index: 6, kind: input, shape index: {}]
  %s7 = inlined_call_operand.vmem [shape: f32[16,1], index: 7, kind: input, shape index: {}]
  %s8 = inlined_call_operand.vmem [shape: f32[16,1], index: 8, kind: input, shape index: {}]
  %s9 = inlined_call_operand.hbm [shape: bf16[16,144], index: 9, kind: input, shape index: {}]
  %s10 = inlined_call_operand.vmem [shape: f32[16,1], index: 10, kind: input, shape index: {}]
  %s11 = inlined_call_operand.vmem [shape: f32[16,1], index: 11, kind: input, shape index: {}]
  %s12 = inlined_call_operand.hbm [shape: f32[16,128], index: 12, kind: output, shape index: {}]
  %s13 = sld [smem:[#allocation0]]
  $region66: #{tpu_custom_call.1} parent=0
    _
  %s15 = ssub.s32 1, %s13
  %s16 = scalar_select 0, %s15, %s13
  $region1: #{tpu_custom_call.1} parent=0
    #allocation2 [shape = 'u8[4096]{0}', space=vmem, size = 0x1000, scoped, tag = 'input window, operand 5, single buffered']
    #allocation3 [shape = 's32[1]{0}', space=sflag, size = 0x4, scoped, tag = 'scoped memory for tpu_custom_call.1']
    #allocation4 [shape = 's32[1]{0}', space=sflag, size = 0x4, scoped, tag = 'scoped memory for tpu_custom_call.1']
    #allocation5 [shape = 'u8[8192]{0}', space=vmem, size = 0x2000, scoped, tag = 'input window, operand 9, single buffered']
    #allocation6 [shape = 's32[1]{0}', space=sflag, size = 0x4, scoped, tag = 'scoped memory for tpu_custom_call.1']
    #allocation7 [shape = 'u8[8192]{0}', space=vmem, size = 0x2000, scoped, tag = 'output window, operand 0, single buffered']
    %17 = vsyncpa [#allocation3], 0
    %18 = vsyncpa [#allocation6], 0
    %19 = vsyncpa [#allocation4], 0
    // Predicated region
    $region2: #{tpu_custom_call.1} parent=1 // pred_check
      _
    $region3: #{tpu_custom_call.1} parent=1 // pred_check_branch
      %21 = sbr.rel (0) target = $region5
    $region4: #{tpu_custom_call.1} parent=1 // pred_region
      _
    $region5: #{tpu_custom_call.1} parent=1 // pred_fallthru
      _
    // Predicated region
    $region6: #{tpu_custom_call.1} parent=1 // pred_check
      _
    $region7: #{tpu_custom_call.1} parent=1 // pred_check_branch
      %23 = sbr.rel (0) target = $region9
    $region8: #{tpu_custom_call.1} parent=1 // pred_region
      _
    $region9: #{tpu_custom_call.1} parent=1 // pred_fallthru
      _
    // Predicated region
    $region10: #{tpu_custom_call.1} parent=1 // pred_check
      _
    $region11: #{tpu_custom_call.1} parent=1 // pred_check_branch
      %25 = sbr.rel (0) target = $region13
    $region12: #{tpu_custom_call.1} parent=1 // pred_region
      _
    $region13: #{tpu_custom_call.1} parent=1 // pred_fallthru
      _
    // Predicated region
    $region14: #{tpu_custom_call.1} parent=1 // pred_check
      _
    $region15: #{tpu_custom_call.1} parent=1 // pred_check_branch
      %27 = sbr.rel (0) target = $region17
    $region16: #{tpu_custom_call.1} parent=1 // pred_region
      _
    $region17: #{tpu_custom_call.1} parent=1 // pred_fallthru
      _
    // Predicated region
    $region18: #{tpu_custom_call.1} parent=1 // pred_check
      _
    $region19: #{tpu_custom_call.1} parent=1 // pred_check_branch
      %29 = sbr.rel (0) target = $region21
    $region20: #{tpu_custom_call.1} parent=1 // pred_region
      _
    $region21: #{tpu_custom_call.1} parent=1 // pred_fallthru
      _
    // Predicated region
    $region22: #{tpu_custom_call.1} parent=1 // pred_check
      _
    $region23: #{tpu_custom_call.1} parent=1 // pred_check_branch
      %31 = sbr.rel (0) target = $region25
    $region24: #{tpu_custom_call.1} parent=1 // pred_region
      %s33 = ssub.s32 128, 128
      %34 = vsyncadd [#allocation3], %s33
      %s35 = sshll.u32 [#allocation2], 4
      %s36 = int_to_ptr.vmem [resolvable:$true] %s35
      %41 = dma.hbm_to_vmem [thread:$0]  %s5, 128, %s36, [#allocation3], 64, 64, 4
    $region25: #{tpu_custom_call.1} parent=1 // pred_fallthru
      _
    // Predicated region
    $region26: #{tpu_custom_call.1} parent=1 // pred_check
      _
    $region27: #{tpu_custom_call.1} parent=1 // pred_check_branch
      %43 = sbr.rel (0) target = $region29
    $region28: #{tpu_custom_call.1} parent=1 // pred_region
      _
    $region29: #{tpu_custom_call.1} parent=1 // pred_fallthru
      _
    // Predicated region
    $region30: #{tpu_custom_call.1} parent=1 // pred_check
      _
    $region31: #{tpu_custom_call.1} parent=1 // pred_check_branch
      %45 = sbr.rel (0) target = $region33
    $region32: #{tpu_custom_call.1} parent=1 // pred_region
      _
    $region33: #{tpu_custom_call.1} parent=1 // pred_fallthru
      _
    // Predicated region
    $region34: #{tpu_custom_call.1} parent=1 // pred_check
      _
    $region35: #{tpu_custom_call.1} parent=1 // pred_check_branch
      %47 = sbr.rel (0) target = $region37
    $region36: #{tpu_custom_call.1} parent=1 // pred_region
      _
    $region37: #{tpu_custom_call.1} parent=1 // pred_fallthru
      _
    // Predicated region
    $region38: #{tpu_custom_call.1} parent=1 // pred_check
      _
    $region39: #{tpu_custom_call.1} parent=1 // pred_check_branch
      %49 = sbr.rel (0) target = $region41
    $region40: #{tpu_custom_call.1} parent=1 // pred_region
      %s51 = ssub.s32 256, 256
      %52 = vsyncadd [#allocation6], %s51
      %s53 = sshll.u32 [#allocation5], 4
      %s54 = int_to_ptr.vmem [resolvable:$true] %s53
      %59 = dma.hbm_to_vmem [thread:$0]  %s9, 256, %s54, [#allocation6], 128, 128, 8
    $region41: #{tpu_custom_call.1} parent=1 // pred_fallthru
      _
    // Predicated region
    $region42: #{tpu_custom_call.1} parent=1 // pred_check
      _
    $region43: #{tpu_custom_call.1} parent=1 // pred_check_branch
      %61 = sbr.rel (0) target = $region45
    $region44: #{tpu_custom_call.1} parent=1 // pred_region
      _
    $region45: #{tpu_custom_call.1} parent=1 // pred_fallthru
      _
    // Predicated region
    $region46: #{tpu_custom_call.1} parent=1 // pred_check
      _
    $region47: #{tpu_custom_call.1} parent=1 // pred_check_branch
      %63 = sbr.rel (0) target = $region49
    $region48: #{tpu_custom_call.1} parent=1 // pred_region
      _
    $region49: #{tpu_custom_call.1} parent=1 // pred_fallthru
      _
    // Predicated region
    $region50: #{tpu_custom_call.1} parent=1 // pred_check
      _
    $region51: #{tpu_custom_call.1} parent=1 // pred_check_branch
      %65 = sbr.rel (0) target = $region53
    $region52: #{tpu_custom_call.1} parent=1 // pred_region
      %66 = dma.done [#allocation3], 128
    $region53: #{tpu_custom_call.1} parent=1 // pred_fallthru
      _
    // Predicated region
    $region54: #{tpu_custom_call.1} parent=1 // pred_check
      _
    $region55: #{tpu_custom_call.1} parent=1 // pred_check_branch
      %68 = sbr.rel (0) target = $region57
    $region56: #{tpu_custom_call.1} parent=1 // pred_region
      %69 = dma.done [#allocation6], 256
    $region57: #{tpu_custom_call.1} parent=1 // pred_fallthru
      _
    %v71 = vld [vmem:[%s0] sm:$0xff]
    %v72 = vld [vmem:[%s0 + $0x8] sm:$0x3]
    %v73 = vld [vmem:[%s1] sm:$0xf]
    %v74 = vld [vmem:[%s1 + $0x4] sm:$0xf]
    %v75 = vld [vmem:[%s1 + $0x8] sm:$0xf]
    %v76 = vld [vmem:[%s1 + $0xc] sm:$0xf]
    %v77 = vld [vmem:[%s1 + $0x10] sm:$0xf]
    %v78 = vld [vmem:[%s1 + $0x14] sm:$0xf]
    %v79 = vld [vmem:[%s1 + $0x18] sm:$0xf]
    %v80 = vld [vmem:[%s1 + $0x1c] sm:$0xf]
    %v81 = vld [vmem:[%s1 + $0x20] sm:$0xf]
    %v82 = vld [vmem:[%s1 + $0x24] sm:$0xf]
    %v83 = vld [vmem:[%s1 + $0x28] sm:$0xf]
    %v84 = vld [vmem:[%s1 + $0x2c] sm:$0xf]
    %v85 = vld [vmem:[%s1 + $0x30] sm:$0xf]
    %v86 = vld [vmem:[%s1 + $0x34] sm:$0xf]
    %v87 = vld [vmem:[%s1 + $0x38] sm:$0xf]
    %v88 = vld [vmem:[%s1 + $0x3c] sm:$0xf]
    %v89 = vld [vmem:[%s1 + $0x40] sm:$0xf]
    %v90 = vld [vmem:[%s1 + $0x44] sm:$0xf]
    %v91 = vld [vmem:[%s2] sm:$0xff]
    %v92 = vld [vmem:[%s2 + $0x8] sm:$0xff]
    %v95 = vunpack.c.l.b16 %v91
    %v96 = vunpack.c.h.b16 %v91
    %v97 = vunpack.c.l.b16 %v92
    %v98 = vunpack.c.h.b16 %v92
    %v99 = vpack.c.b16 %v97, %v95
    %v100 = vpack.c.b16 %v98, %v96
    %v120 = vunpack.c.l.b16 %v73
    %v121 = vunpack.c.l.b16 %v74
    %v122 = vunpack.c.l.b16 %v75
    %v123 = vunpack.c.l.b16 %v76
    %v124 = vunpack.c.l.b16 %v77
    %v125 = vunpack.c.l.b16 %v78
    %v126 = vunpack.c.l.b16 %v79
    %v127 = vunpack.c.l.b16 %v80
    %v128 = vunpack.c.l.b16 %v81
    %v129 = vunpack.c.l.b16 %v82
    %v130 = vunpack.c.l.b16 %v83
    %v131 = vunpack.c.l.b16 %v84
    %v132 = vunpack.c.l.b16 %v85
    %v133 = vunpack.c.l.b16 %v86
    %v134 = vunpack.c.l.b16 %v87
    %v135 = vunpack.c.l.b16 %v88
    %v136 = vunpack.c.l.b16 %v89
    %v137 = vunpack.c.l.b16 %v90
    %v138 = vpack.c.b16 %v121, %v120
    %v139 = vpack.c.b16 %v123, %v122
    %v140 = vpack.c.b16 %v125, %v124
    %v141 = vpack.c.b16 %v127, %v126
    %v142 = vpack.c.b16 %v129, %v128
    %v143 = vpack.c.b16 %v131, %v130
    %v144 = vpack.c.b16 %v133, %v132
    %v145 = vpack.c.b16 %v135, %v134
    %v146 = vpack.c.b16 %v137, %v136
    %vm156 = vcmask 130048
    %v158 = vsel %vm156, %v100, 0
    %160 = vmatprep.subr.bf16.mxu0 0
    %161 = vmatpush1.bf16.msra.mxu0 %v145
    %162 = vmatprep.subr.bf16.mxu0 0
    %163 = vmatpush1.bf16.msra.mxu0 %v144
    %164 = vmatprep.subr.bf16.mxu0 0
    %165 = vmatpush1.bf16.msra.mxu0 %v143
    %166 = vmatprep.subr.bf16.mxu0 0
    %167 = vmatpush1.bf16.msra.mxu0 %v142
    %168 = vmatprep.subr.bf16.mxu0 0
    %169 = vmatpush1.bf16.msra.mxu0 %v141
    %170 = vmatprep.subr.bf16.mxu0 0
    %171 = vmatpush1.bf16.msra.mxu0 %v140
    %172 = vmatprep.subr.bf16.mxu0 0
    %173 = vmatpush1.bf16.msra.mxu0 %v139
    %174 = vmatprep.subr.bf16.mxu0 0
    %175 = vmatpush1.bf16.msra.mxu0 %v138
    %176 = vmatprep.subr.bf16.mxu0 0
    %177 = vmatpush2.bf16.msra.mxu0 0
    %178 = vmatprep.subr.bf16.mxu0 0
    %179 = vmatpush2.bf16.msra.mxu0 0
    %180 = vmatprep.subr.bf16.mxu0 0
    %181 = vmatpush2.bf16.msra.mxu0 0
    %182 = vmatprep.subr.bf16.mxu0 0
    %183 = vmatpush2.bf16.msra.mxu0 0
    %184 = vmatprep.subr.bf16.mxu0 0
    %185 = vmatpush2.bf16.msra.mxu0 0
    %186 = vmatprep.subr.bf16.mxu0 0
    %187 = vmatpush2.bf16.msra.mxu0 0
    %188 = vmatprep.subr.bf16.mxu0 0
    %189 = vmatpush2.bf16.msra.mxu0 0
    %190 = vmatprep.subr.bf16.mxu0 0
    %191 = vmatpush2.bf16.msra.mxu0 %v146
    %192 = vmatprep.mubr.bf16.mxu0 %v158
    %193 = vmatmul.mubr.bf16.gmra.mxu0 %v99
    %v194 = vpop.f32.mrf.mxu0
    %v195 = vadd.f32 0.0, %v194
    %v196 = vpop.f32.mrf.mxu0
    %v197 = vpop.f32.mrf.mxu0
    %v198 = vadd.f32 0.0, %v197
    %v199 = vpop.f32.mrf.mxu0
    %200 = vdwg.mxu0
    %v201 = vld [vmem:[%s3] sm:$0xff]
    %v202 = vld [vmem:[%s3 + $0x8] sm:$0xff]
    %v203 = vld [vmem:[%s4] sm:$0xff]
    %v204 = vld [vmem:[%s4 + $0x8] sm:$0xff]
    %v205 = vlaneseq
    %v206 = vshrl.u32 %v205, 7
    %v207 = vsub.s32 1, %v206
    %v208 = vrot.slane %v72, %v207
    %v209 = vmul.f32 %v195, %v208
    %v210 = vmul.f32 %v198, %v208
    %211 = vadd.xlane.f32.xlu0 %v209
    %v212 = vpop.xlane.xlu0 %211
    %213 = vadd.xlane.f32.xlu0 %v210
    %v214 = vpop.xlane.xlu0 %213
    %v215 = vmul.f32 %v212, 0.0078125
    %v216 = vmul.f32 %v214, 0.0078125
    %v217 = vsub.f32 %v195, %v215
    %v218 = vsub.f32 %v198, %v216
    %v219 = vmul.f32 %v217, %v208
    %v220 = vmul.f32 %v218, %v208
    %v221 = vmul.f32 %v219, %v219
    %v222 = vmul.f32 %v220, %v220
    %223 = vadd.xlane.f32.xlu0 %v221
    %v224 = vpop.xlane.xlu0 %223
    %225 = vadd.xlane.f32.xlu0 %v222
    %v226 = vpop.xlane.xlu0 %225
    %v227 = vmul.f32 %v224, 0.0078125
    %v228 = vmul.f32 %v226, 0.0078125
    %v229 = vadd.f32 %v227, 1e-05
    %v230 = vadd.f32 %v228, 1e-05
    %v231 = vrsqrt.pop %v229
    %v232 = vrsqrt.pop %v230
    %v233 = vmul.f32 %v217, %v231
    %v234 = vmul.f32 %v218, %v232
    %236 = vset.pattern.permute.xlu0 0
    %237 = vperm.xlu0 %236, %v201
    %v238 = vpop.permute.xlu0 %237
    %241 = vset.pattern.permute.xlu0 0
    %242 = vperm.xlu0 %241, %v202
    %v243 = vpop.permute.xlu0 %242
    %v245 = vmul.f32 %v233, %v238
    %v246 = vmul.f32 %v234, %v243
    %248 = vset.pattern.permute.xlu0 0
    %249 = vperm.xlu0 %248, %v203
    %v250 = vpop.permute.xlu0 %249
    %253 = vset.pattern.permute.xlu0 0
    %254 = vperm.xlu0 %253, %v204
    %v255 = vpop.permute.xlu0 %254
    %v257 = vadd.f32 %v245, %v250
    %v258 = vadd.f32 %v246, %v255
    %v259 = vmax.f32 %v257, 0.0
    %v260 = vmax.f32 %v258, 0.0
    %v261 = vld [vmem:[#allocation2] sm:$0xf]
    %v262 = vld [vmem:[#allocation2 + $0x4] sm:$0xf]
    %v263 = vld [vmem:[%s6] sm:$0xf]
    %v264 = vld [vmem:[%s6 + $0x4] sm:$0xf]
    %v267 = vunpack.c.l.b16 %v263
    %v268 = vunpack.c.l.b16 %v264
    %v269 = vpack.c.b16 %v268, %v267
    %v272 = vunpack.c.l.b16 %v261
    %v273 = vunpack.c.l.b16 %v262
    %v274 = vpack.c.b16 %v273, %v272
    %v277 = vsel %vm156, %v269, 0
    %279 = vmatprep.subr.bf16.mxu0 0
    %280 = vmatpush1.bf16.msra.mxu0 0
    %281 = vmatprep.subr.bf16.mxu0 0
    %282 = vmatpush1.bf16.msra.mxu0 0
    %283 = vmatprep.subr.bf16.mxu0 0
    %284 = vmatpush1.bf16.msra.mxu0 0
    %285 = vmatprep.subr.bf16.mxu0 0
    %286 = vmatpush1.bf16.msra.mxu0 0
    %287 = vmatprep.subr.bf16.mxu0 0
    %288 = vmatpush1.bf16.msra.mxu0 0
    %289 = vmatprep.subr.bf16.mxu0 0
    %290 = vmatpush1.bf16.msra.mxu0 0
    %291 = vmatprep.subr.bf16.mxu0 0
    %292 = vmatpush1.bf16.msra.mxu0 0
    %293 = vmatprep.subr.bf16.mxu0 0
    %294 = vmatpush1.bf16.msra.mxu0 %v274
    %295 = vmatprep.subr.bf16.mxu0 0
    %296 = vmatpush2.bf16.msra.mxu0 0
    %297 = vmatprep.subr.bf16.mxu0 0
    %298 = vmatpush2.bf16.msra.mxu0 0
    %299 = vmatprep.subr.bf16.mxu0 0
    %300 = vmatpush2.bf16.msra.mxu0 0
    %301 = vmatprep.subr.bf16.mxu0 0
    %302 = vmatpush2.bf16.msra.mxu0 0
    %303 = vmatprep.subr.bf16.mxu0 0
    %304 = vmatpush2.bf16.msra.mxu0 0
    %305 = vmatprep.subr.bf16.mxu0 0
    %306 = vmatpush2.bf16.msra.mxu0 0
    %307 = vmatprep.subr.bf16.mxu0 0
    %308 = vmatpush2.bf16.msra.mxu0 0
    %309 = vmatprep.subr.bf16.mxu0 0
    %310 = vmatpush2.bf16.msra.mxu0 0
    %311 = vmatprep.mubr.bf16.mxu0 0
    %312 = vmatmul.mubr.bf16.gmra.mxu0 %v277
    %v313 = vpop.f32.mrf.mxu0
    %v314 = vadd.f32 0.0, %v313
    %v315 = vpop.f32.mrf.mxu0
    %v316 = vpop.f32.mrf.mxu0
    %v317 = vadd.f32 0.0, %v316
    %v318 = vpop.f32.mrf.mxu0
    %319 = vdwg.mxu0
    %v320 = vld [vmem:[%s7] sm:$0xff]
    %v321 = vld [vmem:[%s7 + $0x8] sm:$0xff]
    %v322 = vld [vmem:[%s8] sm:$0xff]
    %v323 = vld [vmem:[%s8 + $0x8] sm:$0xff]
    %v324 = vmul.f32 %v314, %v208
    %v325 = vmul.f32 %v317, %v208
    %326 = vadd.xlane.f32.xlu0 %v324
    %v327 = vpop.xlane.xlu0 %326
    %328 = vadd.xlane.f32.xlu0 %v325
    %v329 = vpop.xlane.xlu0 %328
    %v330 = vmul.f32 %v327, 0.0078125
    %v331 = vmul.f32 %v329, 0.0078125
    %v332 = vsub.f32 %v314, %v330
    %v333 = vsub.f32 %v317, %v331
    %v334 = vmul.f32 %v332, %v208
    %v335 = vmul.f32 %v333, %v208
    %v336 = vmul.f32 %v334, %v334
    %v337 = vmul.f32 %v335, %v335
    %338 = vadd.xlane.f32.xlu0 %v336
    %v339 = vpop.xlane.xlu0 %338
    %340 = vadd.xlane.f32.xlu0 %v337
    %v341 = vpop.xlane.xlu0 %340
    %v342 = vmul.f32 %v339, 0.0078125
    %v343 = vmul.f32 %v341, 0.0078125
    %v344 = vadd.f32 %v342, 1e-05
    %v345 = vadd.f32 %v343, 1e-05
    %v346 = vrsqrt.pop %v344
    %v347 = vrsqrt.pop %v345
    %v348 = vmul.f32 %v332, %v346
    %v349 = vmul.f32 %v333, %v347
    %351 = vset.pattern.permute.xlu0 0
    %352 = vperm.xlu0 %351, %v320
    %v353 = vpop.permute.xlu0 %352
    %356 = vset.pattern.permute.xlu0 0
    %357 = vperm.xlu0 %356, %v321
    %v358 = vpop.permute.xlu0 %357
    %v360 = vmul.f32 %v348, %v353
    %v361 = vmul.f32 %v349, %v358
    %363 = vset.pattern.permute.xlu0 0
    %364 = vperm.xlu0 %363, %v322
    %v365 = vpop.permute.xlu0 %364
    %368 = vset.pattern.permute.xlu0 0
    %369 = vperm.xlu0 %368, %v323
    %v370 = vpop.permute.xlu0 %369
    %v372 = vadd.f32 %v360, %v365
    %v373 = vadd.f32 %v361, %v370
    %374 = vrot.lane.b32.xlu0 %v259, 9
    %v375 = vpop.permute.xlu0 %374
    %376 = vrot.lane.b32.xlu0 %v260, 9
    %v377 = vpop.permute.xlu0 %376
    %v378 = vlaneseq
    %v379 = vshrl.u32 %v378, 7
    %v380 = vsub.s32 0, %v379
    %v381 = vrot.slane %v71, %v380
    %v382 = vmul.f32 %v375, %v381
    %v383 = vmul.f32 %v377, %v381
    %384 = vrot.lane.b32.xlu0 %v259, 8
    %v385 = vpop.permute.xlu0 %384
    %386 = vrot.lane.b32.xlu0 %v260, 8
    %v387 = vpop.permute.xlu0 %386
    %v388 = vlaneseq
    %v389 = vshrl.u32 %v388, 7
    %v390 = vsub.s32 1, %v389
    %v391 = vrot.slane %v71, %v390
    %v392 = vmul.f32 %v385, %v391
    %v393 = vmul.f32 %v387, %v391
    %394 = vrot.lane.b32.xlu0 %v259, 7
    %v395 = vpop.permute.xlu0 %394
    %396 = vrot.lane.b32.xlu0 %v260, 7
    %v397 = vpop.permute.xlu0 %396
    %v398 = vlaneseq
    %v399 = vshrl.u32 %v398, 7
    %v400 = vsub.s32 2, %v399
    %v401 = vrot.slane %v71, %v400
    %v402 = vmul.f32 %v395, %v401
    %v403 = vmul.f32 %v397, %v401
    %404 = vrot.lane.b32.xlu0 %v259, 1
    %v405 = vpop.permute.xlu0 %404
    %406 = vrot.lane.b32.xlu0 %v260, 1
    %v407 = vpop.permute.xlu0 %406
    %v408 = vlaneseq
    %v409 = vshrl.u32 %v408, 7
    %v410 = vsub.s32 3, %v409
    %v411 = vrot.slane %v71, %v410
    %v412 = vmul.f32 %v405, %v411
    %v413 = vmul.f32 %v407, %v411
    %414 = vrot.lane.b32.xlu0 %v259, 127
    %v415 = vpop.permute.xlu0 %414
    %416 = vrot.lane.b32.xlu0 %v260, 127
    %v417 = vpop.permute.xlu0 %416
    %v418 = vlaneseq
    %v419 = vshrl.u32 %v418, 7
    %v420 = vsub.s32 5, %v419
    %v421 = vrot.slane %v71, %v420
    %v422 = vmul.f32 %v415, %v421
    %v423 = vmul.f32 %v417, %v421
    %424 = vrot.lane.b32.xlu0 %v259, 121
    %v425 = vpop.permute.xlu0 %424
    %426 = vrot.lane.b32.xlu0 %v260, 121
    %v427 = vpop.permute.xlu0 %426
    %v428 = vlaneseq
    %v429 = vshrl.u32 %v428, 7
    %v430 = vsub.s32 6, %v429
    %v431 = vrot.slane %v71, %v430
    %v432 = vmul.f32 %v425, %v431
    %v433 = vmul.f32 %v427, %v431
    %434 = vrot.lane.b32.xlu0 %v259, 120
    %v435 = vpop.permute.xlu0 %434
    %436 = vrot.lane.b32.xlu0 %v260, 120
    %v437 = vpop.permute.xlu0 %436
    %v438 = vlaneseq
    %v439 = vshrl.u32 %v438, 7
    %v440 = vsub.s32 7, %v439
    %v441 = vrot.slane %v71, %v440
    %v442 = vmul.f32 %v435, %v441
    %v443 = vmul.f32 %v437, %v441
    %444 = vrot.lane.b32.xlu0 %v259, 119
    %v445 = vpop.permute.xlu0 %444
    %446 = vrot.lane.b32.xlu0 %v260, 119
    %v447 = vpop.permute.xlu0 %446
    %v448 = vlaneseq
    %v449 = vshrl.u32 %v448, 7
    %v450 = vsub.s32 0, %v449
    %v451 = vrot.slane %v72, %v450
    %v452 = vmul.f32 %v445, %v451
    %v453 = vmul.f32 %v447, %v451
    %v454 = vpack.c.bf16 %v383, %v382
    %v455 = vpack.c.bf16 %v393, %v392
    %v456 = vpack.c.bf16 %v403, %v402
    %v457 = vpack.c.bf16 %v413, %v412
    %v458 = vpack.c.bf16 %v260, %v259
    %v459 = vpack.c.bf16 %v423, %v422
    %v460 = vpack.c.bf16 %v433, %v432
    %v461 = vpack.c.bf16 %v443, %v442
    %v462 = vpack.c.bf16 %v453, %v452
    %v463 = vld [vmem:[#allocation5] sm:$0xff]
    %v464 = vld [vmem:[#allocation5 + $0x8] sm:$0xff]
    %v467 = vunpack.c.l.b16 %v463
    %v468 = vunpack.c.h.b16 %v463
    %v469 = vunpack.c.l.b16 %v464
    %v470 = vunpack.c.h.b16 %v464
    %v471 = vpack.c.b16 %v469, %v467
    %v472 = vpack.c.b16 %v470, %v468
    %v475 = vsel %vm156, %v472, 0
    %477 = vmatprep.subr.bf16.mxu0 0
    %478 = vmatpush1.bf16.msra.mxu0 %v461
    %479 = vmatprep.subr.bf16.mxu0 0
    %480 = vmatpush1.bf16.msra.mxu0 %v460
    %481 = vmatprep.subr.bf16.mxu0 0
    %482 = vmatpush1.bf16.msra.mxu0 %v459
    %483 = vmatprep.subr.bf16.mxu0 0
    %484 = vmatpush1.bf16.msra.mxu0 %v458
    %485 = vmatprep.subr.bf16.mxu0 0
    %486 = vmatpush1.bf16.msra.mxu0 %v457
    %487 = vmatprep.subr.bf16.mxu0 0
    %488 = vmatpush1.bf16.msra.mxu0 %v456
    %489 = vmatprep.subr.bf16.mxu0 0
    %490 = vmatpush1.bf16.msra.mxu0 %v455
    %491 = vmatprep.subr.bf16.mxu0 0
    %492 = vmatpush1.bf16.msra.mxu0 %v454
    %493 = vmatprep.subr.bf16.mxu0 0
    %494 = vmatpush2.bf16.msra.mxu0 0
    %495 = vmatprep.subr.bf16.mxu0 0
    %496 = vmatpush2.bf16.msra.mxu0 0
    %497 = vmatprep.subr.bf16.mxu0 0
    %498 = vmatpush2.bf16.msra.mxu0 0
    %499 = vmatprep.subr.bf16.mxu0 0
    %500 = vmatpush2.bf16.msra.mxu0 0
    %501 = vmatprep.subr.bf16.mxu0 0
    %502 = vmatpush2.bf16.msra.mxu0 0
    %503 = vmatprep.subr.bf16.mxu0 0
    %504 = vmatpush2.bf16.msra.mxu0 0
    %505 = vmatprep.subr.bf16.mxu0 0
    %506 = vmatpush2.bf16.msra.mxu0 0
    %507 = vmatprep.subr.bf16.mxu0 0
    %508 = vmatpush2.bf16.msra.mxu0 %v462
    %509 = vmatprep.mubr.bf16.mxu0 %v475
    %510 = vmatmul.mubr.bf16.gmra.mxu0 %v471
    %v511 = vpop.f32.mrf.mxu0
    %v512 = vadd.f32 0.0, %v511
    %v513 = vpop.f32.mrf.mxu0
    %v514 = vpop.f32.mrf.mxu0
    %v515 = vadd.f32 0.0, %v514
    %v516 = vpop.f32.mrf.mxu0
    %517 = vdwg.mxu0
    %v518 = vld [vmem:[%s10] sm:$0xff]
    %v519 = vld [vmem:[%s10 + $0x8] sm:$0xff]
    %v520 = vld [vmem:[%s11] sm:$0xff]
    %v521 = vld [vmem:[%s11 + $0x8] sm:$0xff]
    %v522 = vmul.f32 %v512, %v208
    %v523 = vmul.f32 %v515, %v208
    %524 = vadd.xlane.f32.xlu0 %v522
    %v525 = vpop.xlane.xlu0 %524
    %526 = vadd.xlane.f32.xlu0 %v523
    %v527 = vpop.xlane.xlu0 %526
    %v528 = vmul.f32 %v525, 0.0078125
    %v529 = vmul.f32 %v527, 0.0078125
    %v530 = vsub.f32 %v512, %v528
    %v531 = vsub.f32 %v515, %v529
    %v532 = vmul.f32 %v530, %v208
    %v533 = vmul.f32 %v531, %v208
    %v534 = vmul.f32 %v532, %v532
    %v535 = vmul.f32 %v533, %v533
    %536 = vadd.xlane.f32.xlu0 %v534
    %v537 = vpop.xlane.xlu0 %536
    %538 = vadd.xlane.f32.xlu0 %v535
    %v539 = vpop.xlane.xlu0 %538
    %v540 = vmul.f32 %v537, 0.0078125
    %v541 = vmul.f32 %v539, 0.0078125
    %v542 = vadd.f32 %v540, 1e-05
    %v543 = vadd.f32 %v541, 1e-05
    %v544 = vrsqrt.pop %v542
    %v545 = vrsqrt.pop %v543
    %v546 = vmul.f32 %v530, %v544
    %v547 = vmul.f32 %v531, %v545
    %549 = vset.pattern.permute.xlu0 0
    %550 = vperm.xlu0 %549, %v518
    %v551 = vpop.permute.xlu0 %550
    %554 = vset.pattern.permute.xlu0 0
    %555 = vperm.xlu0 %554, %v519
    %v556 = vpop.permute.xlu0 %555
    %v558 = vmul.f32 %v546, %v551
    %v559 = vmul.f32 %v547, %v556
    %561 = vset.pattern.permute.xlu0 0
    %562 = vperm.xlu0 %561, %v520
    %v563 = vpop.permute.xlu0 %562
    %566 = vset.pattern.permute.xlu0 0
    %567 = vperm.xlu0 %566, %v521
    %v568 = vpop.permute.xlu0 %567
    %v570 = vadd.f32 %v558, %v563
    %v571 = vadd.f32 %v559, %v568
    %v572 = vadd.f32 %v570, %v372
    %v573 = vadd.f32 %v571, %v373
    %v574 = vmax.f32 %v572, 0.0
    %v575 = vmax.f32 %v573, 0.0
    %576 = vst [vmem:[#allocation7] sm:$0xff] %v574
    %577 = vst [vmem:[#allocation7 + $0x8] sm:$0xff] %v575
    // Predicated region
    $region58: #{tpu_custom_call.1} parent=1 // pred_check
      _
    $region59: #{tpu_custom_call.1} parent=1 // pred_check_branch
      %579 = sbr.rel (0) target = $region61
    $region60: #{tpu_custom_call.1} parent=1 // pred_region
      %s581 = ssub.s32 256, 256
      %582 = vsyncadd [#allocation4], %s581
      %s583 = sshll.u32 [#allocation7], 4
      %s584 = int_to_ptr.vmem [resolvable:$true] %s583
      %589 = dma.vmem_to_hbm [thread:$0]  %s584, 256, %s12, [#allocation4], 128, 128, 8
    $region61: #{tpu_custom_call.1} parent=1 // pred_fallthru
      _
    // Predicated region
    $region62: #{tpu_custom_call.1} parent=1 // pred_check
      _
    $region63: #{tpu_custom_call.1} parent=1 // pred_check_branch
      %591 = sbr.rel (0) target = $region65
    $region64: #{tpu_custom_call.1} parent=1 // pred_region
      %592 = dma.done [#allocation4], 256
    $region65: #{tpu_custom_call.1} parent=1 // pred_fallthru
      _
    %593 = vsyncpa [#allocation3], 1
    %594 = vsyncpa [#allocation6], 1
    %595 = vsyncpa [#allocation4], 1

</llo_original>
